<compile_context>
chip_gen: v5e
topology: v5e:2x2
jax: 0.10.0
libtpu: 0.0.40
codegen_flags: <defaults>
</compile_context>

<pallas_src>
import jax
import jax.numpy as jnp
from jax.experimental import pallas as pl
from jax.experimental.pallas import tpu as pltpu


def _gcc_kernel(x_ref, m_ref, a_ref, o_ref):
    # x_ref: (1, S, N)  one channel; conv axis on sublanes, batch*other on lanes
    # m_ref: (1, S, S)  circulant matrix of this channel
    # a_ref: (1, S, 1)  folded (M_c @ pe_c + bias_c) column of this channel
    # o_ref: (1, S, N)
    out = jnp.dot(m_ref[0], x_ref[0], preferred_element_type=jnp.float32)
    o_ref[0] = (out + a_ref[0]).astype(o_ref.dtype)


def gcc_conv2d(x, weight, bias, meta_pe, *, conv_type='H', use_pe=True):
    """Pallas implementation of gcc_Conv2d.forward (instance_kernel_method=None).

    x      : (B, C, H, W) float32, NCHW
    weight : (C, 1, K, 1) for type 'H'  /  (C, 1, 1, K) for type 'W'
    bias   : (C,)
    meta_pe: (1, C, K, 1) / (1, C, 1, K) or None
    """
    B, C, H, W = x.shape
    S = H if conv_type == 'H' else W
    K = weight.shape[2] if conv_type == 'H' else weight.shape[3]
    assert K == S, (
        f"meta_kernel_size ({K}) must equal the feature size ({S}) for "
        f"type '{conv_type}' when instance_kernel_method is None")

    w_flat = weight.reshape(C, S).astype(jnp.float32)             # (C, S)

    # Circulant matrices: M[c, i, j] = w[c, (j - i) mod S]  (contraction dim last)
    idx = (jnp.arange(S)[None, :] - jnp.arange(S)[:, None]) % S
    circ = w_flat[:, idx]                                         # (C, S, S)

    # Fold PE + bias into one per-channel additive column (linearity of conv).
    if use_pe and meta_pe is not None:
        pe_flat = meta_pe.reshape(C, S).astype(jnp.float32)
        addend = jnp.einsum('cij,cj->ci', circ, pe_flat)          # conv applied to pe
    else:
        addend = jnp.zeros((C, S), jnp.float32)
    addend = (addend + bias.astype(jnp.float32)[:, None]).reshape(C, S, 1)

    # Lane-dense per-channel layout: conv axis -> sublanes, batch*other -> lanes.
    if conv_type == 'H':
        xr = x.transpose(1, 2, 0, 3).reshape(C, H, B * W)         # (C, S, N)
    else:  # 'W'
        xr = x.transpose(1, 3, 0, 2).reshape(C, W, B * H)         # (C, S, N)
    N = xr.shape[2]

    # VMEM budget: x + out + circ + addend tiles, double-buffered (+ headroom).
    tile_bytes = 4 * (2 * S * N + S * S + S)
    vmem_need = 2 * tile_bytes + (1 << 20)
    vmem_limit = min(vmem_need, 64 << 20) if vmem_need > (32 << 20) else None

    out = pl.pallas_call(
        _gcc_kernel,
        out_shape=jax.ShapeDtypeStruct((C, S, N), x.dtype),
        grid_spec=pltpu.PrefetchScalarGridSpec(
            num_scalar_prefetch=0,
            grid=(C,),
            in_specs=[
                pl.BlockSpec((1, S, N), lambda c: (c, 0, 0)),     # x (one channel, all batch)
                pl.BlockSpec((1, S, S), lambda c: (c, 0, 0)),     # circulant
                pl.BlockSpec((1, S, 1), lambda c: (c, 0, 0)),     # folded pe+bias column
            ],
            out_specs=pl.BlockSpec((1, S, N), lambda c: (c, 0, 0)),
        ),
        compiler_params=pltpu.CompilerParams(
            dimension_semantics=("parallel",),
            vmem_limit_bytes=vmem_limit),
    )(xr, circ, addend)

    if conv_type == 'H':
        out = out.reshape(C, H, B, W).transpose(2, 0, 1, 3)       # -> (B, C, H, W)
    else:
        out = out.reshape(C, W, B, H).transpose(2, 0, 3, 1)       # -> (B, C, H, W)
    return out.astype(x.dtype)


def _reference(x, weight, bias, meta_pe, *, conv_type='H', use_pe=True):
    """Pure-JAX reference reproducing the torch semantics (cat + conv2d, groups=dim)."""
    B, C, H, W = x.shape
    S = H if conv_type == 'H' else W
    axis = 2 if conv_type == 'H' else 3
    if use_pe and meta_pe is not None:
        x = x + meta_pe
    w_flat = weight.reshape(C, S)
    out = jnp.zeros_like(x)
    for k in range(S):
        out = out + jnp.roll(x, -k, axis=axis) * w_flat[:, k][None, :, None, None]
    return out + bias[None, :, None, None]


if __name__ == "__main__":
    key = jax.random.PRNGKey(0)

    # --- type 'H': dim=4, meta_kernel_size=16, instance_kernel_method=None, use_pe=True ---
    B, C, H, W = 2, 4, 16, 16
    K = H
    kx, kw, kb, kp, key = jax.random.split(key, 5)
    x = jax.random.normal(kx, (B, C, H, W), jnp.float32)
    weight = 0.02 * jax.random.normal(kw, (C, 1, K, 1), jnp.float32)   # ~ trunc_normal_(std=0.02)
    bias = jax.random.normal(kb, (C,), jnp.float32)                    # torch.randn(dim)
    meta_pe = 0.02 * jax.random.normal(kp, (1, C, K, 1), jnp.float32)

    out = jax.block_until_ready(
        gcc_conv2d(x, weight, bias, meta_pe, conv_type='H', use_pe=True))
    ref = _reference(x, weight, bias, meta_pe, conv_type='H', use_pe=True)
    assert out.shape == (B, C, H, W)
    assert jnp.allclose(out, ref, atol=1e-5, rtol=1e-5), float(jnp.max(jnp.abs(out - ref)))

    # --- type 'W' (non-square map to exercise the transposed path) ---
    B2, C2, H2, W2 = 2, 4, 8, 16
    K2 = W2
    kx, kw, kb, kp, key = jax.random.split(key, 5)
    x2 = jax.random.normal(kx, (B2, C2, H2, W2), jnp.float32)
    weight2 = 0.02 * jax.random.normal(kw, (C2, 1, 1, K2), jnp.float32)
    bias2 = jax.random.normal(kb, (C2,), jnp.float32)
    meta_pe2 = 0.02 * jax.random.normal(kp, (1, C2, 1, K2), jnp.float32)

    out2 = jax.block_until_ready(
        gcc_conv2d(x2, weight2, bias2, meta_pe2, conv_type='W', use_pe=True))
    ref2 = _reference(x2, weight2, bias2, meta_pe2, conv_type='W', use_pe=True)
    assert out2.shape == (B2, C2, H2, W2)
    assert jnp.allclose(out2, ref2, atol=1e-5, rtol=1e-5), float(jnp.max(jnp.abs(out2 - ref2)))

    print("KERNEL_OK")
</pallas_src>

<mosaic_0001>
module attributes {stable_mosaic.version = 11 : i64} {
  func.func @_gcc_kernel(%arg0: i32, %arg1: memref<1x16x32xf32, #tpu.memory_space<vmem>>, %arg2: memref<1x16x16xf32, #tpu.memory_space<vmem>>, %arg3: memref<1x16x1xf32, #tpu.memory_space<vmem>>, %arg4: memref<1x16x32xf32, #tpu.memory_space<vmem>>) attributes {dimension_semantics = [#tpu.dimension_semantics<parallel>], iteration_bounds = array<i64: 4>, scalar_prefetch = 0 : i64, scratch_operands = 0 : i64, tpu.core_type = #tpu.core_type<tc>, window_params = [{transform_indices = @transform_0, window_bounds = array<i64: 1, 16, 32>}, {transform_indices = @transform_1, window_bounds = array<i64: 1, 16, 16>}, {transform_indices = @transform_2, window_bounds = array<i64: 1, 16, 1>}, {transform_indices = @transform_3, window_bounds = array<i64: 1, 16, 32>}]} {
    %c0 = arith.constant 0 : index
    %c0_0 = arith.constant 0 : index
    %c0_1 = arith.constant 0 : index
    %0 = vector.load %arg2[%c0, %c0_0, %c0_1] : memref<1x16x16xf32, #tpu.memory_space<vmem>>, vector<1x16x16xf32>
    %1 = vector.shape_cast %0 : vector<1x16x16xf32> to vector<16x16xf32>
    %c0_2 = arith.constant 0 : index
    %c0_3 = arith.constant 0 : index
    %c0_4 = arith.constant 0 : index
    %2 = vector.load %arg1[%c0_2, %c0_3, %c0_4] : memref<1x16x32xf32, #tpu.memory_space<vmem>>, vector<1x16x32xf32>
    %3 = vector.shape_cast %2 : vector<1x16x32xf32> to vector<16x32xf32>
    %cst = arith.constant dense<0.000000e+00> : vector<16x32xf32>
    %4 = tpu.matmul %1, %3, %cst {dimension_numbers = #tpu.dot_dimension_numbers<[1], [0], [0], [1], [0, 0, 1, 1], [], []>} : vector<16x16xf32>, vector<16x32xf32>, vector<16x32xf32> -> vector<16x32xf32>
    %c0_5 = arith.constant 0 : index
    %c0_6 = arith.constant 0 : index
    %c0_7 = arith.constant 0 : index
    %5 = vector.load %arg3[%c0_5, %c0_6, %c0_7] : memref<1x16x1xf32, #tpu.memory_space<vmem>>, vector<1x16x1xf32>
    %6 = vector.shape_cast %5 : vector<1x16x1xf32> to vector<16x1xf32>
    %7 = vector.broadcast %6 : vector<16x1xf32> to vector<16x32xf32>
    %8 = arith.addf %4, %7 : vector<16x32xf32>
    %c0_8 = arith.constant 0 : index
    %c0_9 = arith.constant 0 : index
    %c0_10 = arith.constant 0 : index
    %9 = vector.load %arg4[%c0_8, %c0_9, %c0_10] : memref<1x16x32xf32, #tpu.memory_space<vmem>>, vector<1x16x32xf32>
    %10 = vector.shape_cast %9 : vector<1x16x32xf32> to vector<16x32xf32>
    %11 = vector.shape_cast %8 : vector<16x32xf32> to vector<1x16x32xf32>
    tpu.vector_store %arg4[%c0_8, %c0_9, %c0_10], %11 {strides = array<i32>} : memref<1x16x32xf32, #tpu.memory_space<vmem>>, vector<1x16x32xf32>,
    return
  }
  func.func @transform_0(%arg0: i32) -> (i32, i32, i32) {
    %c0_i32 = arith.constant 0 : i32
    %c0_i32_0 = arith.constant 0 : i32
    %c0_i32_1 = arith.constant 0 : i32
    return %arg0, %c0_i32, %c0_i32_0 : i32, i32, i32
  }
  func.func @transform_1(%arg0: i32) -> (i32, i32, i32) {
    %c0_i32 = arith.constant 0 : i32
    %c0_i32_0 = arith.constant 0 : i32
    %c0_i32_1 = arith.constant 0 : i32
    return %arg0, %c0_i32, %c0_i32_0 : i32, i32, i32
  }
  func.func @transform_2(%arg0: i32) -> (i32, i32, i32) {
    %c0_i32 = arith.constant 0 : i32
    %c0_i32_0 = arith.constant 0 : i32
    %c0_i32_1 = arith.constant 0 : i32
    return %arg0, %c0_i32, %c0_i32_0 : i32, i32, i32
  }
  func.func @transform_3(%arg0: i32) -> (i32, i32, i32) {
    %c0_i32 = arith.constant 0 : i32
    %c0_i32_0 = arith.constant 0 : i32
    %c0_i32_1 = arith.constant 0 : i32
    return %arg0, %c0_i32, %c0_i32_0 : i32, i32, i32
  }
}

</mosaic_0001>

<llo_original>
// kernel: tpu_custom_call.1
$region0: #{tpu_custom_call.1}
  #allocation0 [shape = 'u32[]', space=smem, size = 0x4, offset = 0x4, fixed_abs, tag = 'smem constant byte address 0x4 - core index']
  #allocation1 [shape = 'u32[72,128]{1,0:T(1,128)}', space=vmem, size = 0x9000, scoped, tag = 'internal scratch']
  %s0 = inlined_call_operand.vmem [shape: f32[4,16,32], index: 0, kind: input, shape index: {}]
  %s1 = inlined_call_operand.hbm [shape: f32[4,16,16], index: 1, kind: input, shape index: {}]
  %s2 = inlined_call_operand.vmem [shape: f32[4,16,1], index: 2, kind: input, shape index: {}]
  %s3 = inlined_call_operand.hbm [shape: f32[4,16,32], index: 3, kind: output, shape index: {}]
  %s4 = sld [smem:[#allocation0]]
  $region49: #{tpu_custom_call.1} parent=0
    _
  %s6 = ssub.s32 1, %s4
  %s7 = scalar_select 0, %s6, %s4
  $region1: #{tpu_custom_call.1} parent=0
    #allocation2 [shape = 'u8[16384]{0}', space=vmem, size = 0x4000, scoped, tag = 'input window, operand 1']
    #allocation3 [shape = 's32[2]{0}', space=sflag, size = 0x8, scoped, tag = 'scoped memory for tpu_custom_call.1']
    #allocation4 [shape = 's32[2]{0}', space=sflag, size = 0x8, scoped, tag = 'scoped memory for tpu_custom_call.1']
    #allocation5 [shape = 'u8[16384]{0}', space=vmem, size = 0x4000, scoped, tag = 'output window, operand 0']
    %8 = vsyncpa [#allocation3], 0
    %s9 = scalar_lea.sflag [#allocation3], 1
    %10 = vsyncpa %s9, 0
    %11 = vsyncpa [#allocation4], 0
    %s12 = scalar_lea.sflag [#allocation4], 1
    %13 = vsyncpa %s12, 0
    loop: start=0, step=1, limit=6
    $region2: #{tpu_custom_call.1} parent=1 // loop_pre_header
      _
    $region3: #{tpu_custom_call.1} parent=1 // loop_header
      %s15 = sphi 0, %s19
      %p16 = scmp.ge.s32.totalorder %s15, 6
      %s25 = sphi 0, %s27
      %s28 = sphi 0, %s25
      %s29 = sphi 0, %s28
      %s45 = sphi 0, %s29
      %s51 = sphi 0, %s53
      %s54 = sphi 0, %s51
      %s55 = sphi 0, %s54
      %s71 = sphi 0, %s55
      %s77 = sphi 0, %s79
      %s80 = sphi 0, %s77
      %s81 = sphi 0, %s80
      %s97 = sphi 0, %s81
      %s103 = sphi 0, %s105
      %s106 = sphi 0, %s103
      %s107 = sphi 0, %s106
      %s123 = sphi 0, %s107
    $region4: #{tpu_custom_call.1} parent=1 // loop_header_branch
      %18 = sbr.rel (%p16) target = $region8
    $region5: #{tpu_custom_call.1} parent=1 // loop_body
      %s20 = ssub.s32 %s15, 1
      %s21 = ssub.s32 %s15, 2
      %s22 = sadd.s32 %s15, 1
      %s23 = ssub.s32 %s15, %s22
      %p24 = scmp.eq.s32.totalorder %s23, 0
      %s26 = sadd.s32 %s25, 1
      %s27 = scalar_select %p24, %s25, %s26
      %p30 = pneg %p24
      %p31 = scmp.eq.s32.totalorder %s15, 3
      %p32 = por %p30, %p31
      %p33 = scmp.ne.s32.totalorder %s25, %s28
      %p34 = scmp.eq.s32.totalorder %s15, 0
      %p35 = por %p33, %p34
      %p36 = scmp.ne.s32.totalorder %s25, %s28
      %p37 = scmp.eq.s32.totalorder %s20, 3
      %p38 = por %p36, %p37
      %p39 = scmp.ne.s32.totalorder %s28, %s29
      %p40 = scmp.eq.s32.totalorder %s20, 0
      %p41 = por %p39, %p40
      %p42 = scmp.ne.s32.totalorder %s28, %s29
      %p43 = scmp.eq.s32.totalorder %s21, 3
      %p44 = por %p42, %p43
      %p46 = scmp.ne.s32.totalorder %s29, %s45
      %p47 = scmp.eq.s32.totalorder %s21, 0
      %p48 = por %p46, %p47
      %s49 = ssub.s32 %s15, %s22
      %p50 = scmp.eq.s32.totalorder %s49, 0
      %s52 = sadd.s32 %s51, 1
      %s53 = scalar_select %p50, %s51, %s52
      %p56 = pneg %p50
      %p57 = scmp.eq.s32.totalorder %s15, 3
      %p58 = por %p56, %p57
      %p59 = scmp.ne.s32.totalorder %s51, %s54
      %p60 = scmp.eq.s32.totalorder %s15, 0
      %p61 = por %p59, %p60
      %p62 = scmp.ne.s32.totalorder %s51, %s54
      %p63 = scmp.eq.s32.totalorder %s20, 3
      %p64 = por %p62, %p63
      %p65 = scmp.ne.s32.totalorder %s54, %s55
      %p66 = scmp.eq.s32.totalorder %s20, 0
      %p67 = por %p65, %p66
      %p68 = scmp.ne.s32.totalorder %s54, %s55
      %p69 = scmp.eq.s32.totalorder %s21, 3
      %p70 = por %p68, %p69
      %p72 = scmp.ne.s32.totalorder %s55, %s71
      %p73 = scmp.eq.s32.totalorder %s21, 0
      %p74 = por %p72, %p73
      %s75 = ssub.s32 %s15, %s22
      %p76 = scmp.eq.s32.totalorder %s75, 0
      %s78 = sadd.s32 %s77, 1
      %s79 = scalar_select %p76, %s77, %s78
      %p82 = pneg %p76
      %p83 = scmp.eq.s32.totalorder %s15, 3
      %p84 = por %p82, %p83
      %p85 = scmp.ne.s32.totalorder %s77, %s80
      %p86 = scmp.eq.s32.totalorder %s15, 0
      %p87 = por %p85, %p86
      %p88 = scmp.ne.s32.totalorder %s77, %s80
      %p89 = scmp.eq.s32.totalorder %s20, 3
      %p90 = por %p88, %p89
      %p91 = scmp.ne.s32.totalorder %s80, %s81
      %p92 = scmp.eq.s32.totalorder %s20, 0
      %p93 = por %p91, %p92
      %p94 = scmp.ne.s32.totalorder %s80, %s81
      %p95 = scmp.eq.s32.totalorder %s21, 3
      %p96 = por %p94, %p95
      %p98 = scmp.ne.s32.totalorder %s81, %s97
      %p99 = scmp.eq.s32.totalorder %s21, 0
      %p100 = por %p98, %p99
      %s101 = ssub.s32 %s15, %s22
      %p102 = scmp.eq.s32.totalorder %s101, 0
      %s104 = sadd.s32 %s103, 1
      %s105 = scalar_select %p102, %s103, %s104
      %p108 = pneg %p102
      %p109 = scmp.eq.s32.totalorder %s15, 3
      %p110 = por %p108, %p109
      %p111 = scmp.ne.s32.totalorder %s103, %s106
      %p112 = scmp.eq.s32.totalorder %s15, 0
      %p113 = por %p111, %p112
      %p114 = scmp.ne.s32.totalorder %s103, %s106
      %p115 = scmp.eq.s32.totalorder %s20, 3
      %p116 = por %p114, %p115
      %p117 = scmp.ne.s32.totalorder %s106, %s107
      %p118 = scmp.eq.s32.totalorder %s20, 0
      %p119 = por %p117, %p118
      %p120 = scmp.ne.s32.totalorder %s106, %s107
      %p121 = scmp.eq.s32.totalorder %s21, 3
      %p122 = por %p120, %p121
      %p124 = scmp.ne.s32.totalorder %s107, %s123
      %p125 = scmp.eq.s32.totalorder %s21, 0
      %p126 = por %p124, %p125
      %p127 = scmp.le.s32.totalorder 1, %s15
      %p128 = scmp.lt.s32.totalorder %s15, 5
      %p129 = pnand %p127, %p128
      %p130 = pneg %p129
      // Predicated region
      $region9: #{tpu_custom_call.1} parent=5 // pred_check
        _
      $region10: #{tpu_custom_call.1} parent=5 // pred_check_branch
        %132 = sbr.rel (%p129) target = $region12
      $region11: #{tpu_custom_call.1} parent=5 // pred_region
        %s133 = ssub.s32 %s15, 1
      $region12: #{tpu_custom_call.1} parent=5 // pred_fallthru
        _
      %p134 = scmp.lt.s32.totalorder %s15, 4
      // Predicated region
      $region13: #{tpu_custom_call.1} parent=5 // pred_check
        %p135 = pneg %p134
      $region14: #{tpu_custom_call.1} parent=5 // pred_check_branch
        %137 = sbr.rel (%p135) target = $region16
      $region15: #{tpu_custom_call.1} parent=5 // pred_region
        // Predicated region
        $region17: #{tpu_custom_call.1} parent=15 // pred_check
          %p138 = pneg %p35
        $region18: #{tpu_custom_call.1} parent=15 // pred_check_branch
          %140 = sbr.rel (%p138) target = $region20
        $region19: #{tpu_custom_call.1} parent=15 // pred_region
          %p141 = scmp.lt.s32.totalorder %s15, 3
          %s142 = scalar_select %p141, %s15, 3
          %s143 = smul.addr %s142, 2
          %s144 = smul.addr %s143, 8
          %s145 = scalar_lea.vmem %s0, %s144
        $region20: #{tpu_custom_call.1} parent=15 // pred_fallthru
          _
        // Predicated region
        $region21: #{tpu_custom_call.1} parent=15 // pred_check
          %p146 = pneg %p61
        $region22: #{tpu_custom_call.1} parent=15 // pred_check_branch
          %148 = sbr.rel (%p146) target = $region24
        $region23: #{tpu_custom_call.1} parent=15 // pred_region
          %s149 = sand.u32 %s51, 1
          %s150 = scalar_lea.sflag [#allocation3], %s149
          %s151 = sand.u32 %s51, 1
          %s152 = smul.addr %s151, 16
          %s153 = scalar_lea.vmem [#allocation2], %s152
          %155 = vsyncadd %s150, 0
          %s156 = smul.addr %s15, 2
          %s157 = smul.addr %s156, 8
          %s158 = scalar_lea.hbm %s1, %s157
          %s159 = sshll.u32 %s158, 4
          %s160 = int_to_ptr.hbm [resolvable:$true] %s159
          %s161 = sshll.u32 %s153, 4
          %s162 = int_to_ptr.vmem [resolvable:$true] %s161
          %167 = dma.hbm_to_vmem [thread:$0]  %s160, 256, %s162, %s150, 128, 128, 8
        $region24: #{tpu_custom_call.1} parent=15 // pred_fallthru
          _
        // Predicated region
        $region25: #{tpu_custom_call.1} parent=15 // pred_check
          %p168 = pneg %p87
        $region26: #{tpu_custom_call.1} parent=15 // pred_check_branch
          %170 = sbr.rel (%p168) target = $region28
        $region27: #{tpu_custom_call.1} parent=15 // pred_region
          %p171 = scmp.lt.s32.totalorder %s15, 3
          %s172 = scalar_select %p171, %s15, 3
          %s173 = smul.addr %s172, 2
          %s174 = smul.addr %s173, 8
          %s175 = scalar_lea.vmem %s2, %s174
        $region28: #{tpu_custom_call.1} parent=15 // pred_fallthru
          _
      $region16: #{tpu_custom_call.1} parent=5 // pred_fallthru
        _
      %p176 = scmp.le.s32.totalorder 1, %s15
      %p177 = scmp.lt.s32.totalorder %s15, 5
      %p178 = pnand %p176, %p177
      %p179 = pneg %p178
      // Predicated region
      $region29: #{tpu_custom_call.1} parent=5 // pred_check
        _
      $region30: #{tpu_custom_call.1} parent=5 // pred_check_branch
        %181 = sbr.rel (%p178) target = $region32
      $region31: #{tpu_custom_call.1} parent=5 // pred_region
        %s182 = ssub.s32 %s15, 1
        %s183 = sand.u32 %s54, 1
        %s184 = scalar_lea.sflag [#allocation3], %s183
        %s185 = sand.u32 %s54, 1
        %s186 = smul.addr %s185, 16
        %s187 = scalar_lea.vmem [#allocation2], %s186
        // Predicated region
        $region33: #{tpu_custom_call.1} parent=31 // pred_check
          %p188 = pneg %p67
        $region34: #{tpu_custom_call.1} parent=31 // pred_check_branch
          %190 = sbr.rel (%p188) target = $region36
        $region35: #{tpu_custom_call.1} parent=31 // pred_region
          %192 = dma.done %s184, 256
        $region36: #{tpu_custom_call.1} parent=31 // pred_fallthru
          _
        %p193 = scmp.lt.s32.totalorder %s20, 3
        %s194 = scalar_select %p193, %s20, 3
        %s195 = smul.addr %s194, 2
        %s196 = smul.addr %s195, 8
        %s197 = scalar_lea.vmem %s0, %s196
        %p198 = pneg %p41
        %p199 = pneg %p38
        %s200 = sand.u32 %s54, 1
        %s201 = scalar_lea.sflag [#allocation3], %s200
        %s202 = sand.u32 %s54, 1
        %s203 = smul.addr %s202, 16
        %s204 = scalar_lea.vmem [#allocation2], %s203
        %p205 = pneg %p67
        %p206 = pneg %p64
        %p207 = scmp.lt.s32.totalorder %s20, 3
        %s208 = scalar_select %p207, %s20, 3
        %s209 = smul.addr %s208, 2
        %s210 = smul.addr %s209, 8
        %s211 = scalar_lea.vmem %s2, %s210
        %p212 = pneg %p93
        %p213 = pneg %p90
        %p214 = pneg %p119
        %p215 = pneg %p116
        %s216 = sand.u32 %s106, 1
        %s217 = scalar_lea.sflag [#allocation4], %s216
        %s218 = sand.u32 %s106, 1
        %s219 = smul.addr %s218, 16
        %s220 = scalar_lea.vmem [#allocation5], %s219
        %p221 = scmp.lt.s32.totalorder %s20, 3
        %s222 = scalar_select %p221, %s20, 3
        %s223 = smul.addr %s222, 2
        %s224 = smul.addr %s223, 8
        %s225 = scalar_lea.vmem %s0, %s224
        %p226 = scmp.lt.s32.totalorder %s20, 3
        %s227 = scalar_select %p226, %s20, 3
        %s228 = smul.addr %s227, 2
        %s229 = smul.addr %s228, 8
        %s230 = scalar_lea.vmem %s2, %s229
        %v231 = vld [vmem:[%s187] sm:$0xff]
        %v232 = vld [vmem:[%s187 + $0x8] sm:$0xff]
        %v233 = vld [vmem:[%s225] sm:$0xff]
        %v234 = vld [vmem:[%s225 + $0x8] sm:$0xff]
        %v235 = vld [vmem:[%s230] sm:$0xff]
        %v236 = vld [vmem:[%s230 + $0x8] sm:$0xff]
        %238 = vset.pattern.permute.xlu0 0
        %239 = vperm.xlu0 %238, %v235
        %v240 = vpop.permute.xlu0 %239
        %243 = vset.pattern.permute.xlu0 0
        %244 = vperm.xlu0 %243, %v236
        %v245 = vpop.permute.xlu0 %244
        %vm247 = vcmask 130048
        %v249 = vsel %vm247, %v231, 0
        %v252 = vsel %vm247, %v232, 0
        %254 = vmatpush.msra.mxu0 0.0
        %255 = vmatpush.msra.mxu0 0.0
        %256 = vmatpush.msra.mxu0 0.0
        %257 = vmatpush.msra.mxu0 0.0
        %258 = vmatpush.msra.mxu0 0.0
        %259 = vmatpush.msra.mxu0 0.0
        %260 = vmatpush.msra.mxu0 0.0
        %261 = vmatpush.msra.mxu0 0.0
        %262 = vmatpush.msra.mxu0 0.0
        %263 = vmatpush.msra.mxu0 0.0
        %264 = vmatpush.msra.mxu0 0.0
        %265 = vmatpush.msra.mxu0 0.0
        %266 = vmatpush.msra.mxu0 0.0
        %267 = vmatpush.msra.mxu0 0.0
        %268 = vmatpush.msra.mxu0 %v234
        %269 = vmatpush.msra.mxu0 %v233
        %270 = vmatmul.f32.gmra.mxu0 %v249
        %v271 = vpop.f32.mrf.mxu0
        %v272 = vadd.f32 %v240, %v271
        %273 = vmatmul.f32.gmra.mxu0 %v252
        %v274 = vpop.f32.mrf.mxu0
        %v275 = vadd.f32 %v245, %v274
        %276 = vdwg.mxu0
        %vm277 = vcmask 261120
        %278 = vst.msk [vmem:[%s220] sm:$0xff] %vm277, %v272
        %279 = vst.msk [vmem:[%s220 + $0x8] sm:$0xff] %vm277, %v275
        %s280 = sand.u32 %s106, 1
        %s281 = scalar_lea.sflag [#allocation4], %s280
        %s282 = sand.u32 %s106, 1
        %s283 = smul.addr %s282, 16
        %s284 = scalar_lea.vmem [#allocation5], %s283
        // Predicated region
        $region37: #{tpu_custom_call.1} parent=31 // pred_check
          %p285 = pneg %p116
        $region38: #{tpu_custom_call.1} parent=31 // pred_check_branch
          %287 = sbr.rel (%p285) target = $region40
        $region39: #{tpu_custom_call.1} parent=31 // pred_region
          %289 = vsyncadd %s281, 0
          %s290 = smul.addr %s20, 2
          %s291 = smul.addr %s290, 8
          %s292 = scalar_lea.hbm %s3, %s291
          %s293 = sshll.u32 %s284, 4
          %s294 = int_to_ptr.vmem [resolvable:$true] %s293
          %s295 = sshll.u32 %s292, 4
          %s296 = int_to_ptr.hbm [resolvable:$true] %s295
          %301 = dma.vmem_to_hbm [thread:$0]  %s294, 256, %s296, %s281, 128, 128, 8
        $region40: #{tpu_custom_call.1} parent=31 // pred_fallthru
          _
      $region32: #{tpu_custom_call.1} parent=5 // pred_fallthru
        _
      %p302 = scmp.le.s32.totalorder 2, %s15
      // Predicated region
      $region41: #{tpu_custom_call.1} parent=5 // pred_check
        %p303 = pneg %p302
      $region42: #{tpu_custom_call.1} parent=5 // pred_check_branch
        %305 = sbr.rel (%p303) target = $region44
      $region43: #{tpu_custom_call.1} parent=5 // pred_region
        %s306 = ssub.s32 %s15, 2
        // Predicated region
        $region45: #{tpu_custom_call.1} parent=43 // pred_check
          %p307 = pneg %p122
        $region46: #{tpu_custom_call.1} parent=43 // pred_check_branch
          %309 = sbr.rel (%p307) target = $region48
        $region47: #{tpu_custom_call.1} parent=43 // pred_region
          %s310 = sand.u32 %s107, 1
          %s311 = scalar_lea.sflag [#allocation4], %s310
          %s312 = sand.u32 %s107, 1
          %s313 = smul.addr %s312, 16
          %s314 = scalar_lea.vmem [#allocation5], %s313
          %316 = dma.done %s311, 256
        $region48: #{tpu_custom_call.1} parent=43 // pred_fallthru
          _
      $region44: #{tpu_custom_call.1} parent=5 // pred_fallthru
        _
    $region6: #{tpu_custom_call.1} parent=1 // loop_footer
      %s19 = sadd.s32 1, %s15
    $region7: #{tpu_custom_call.1} parent=1 // loop_footer_branch
      %14 = sbr.rel target = $region3
    $region8: #{tpu_custom_call.1} parent=1 // loop_exit
      _
    %317 = vsyncpa [#allocation3], 1
    %s318 = scalar_lea.sflag [#allocation3], 1
    %319 = vsyncpa %s318, 1
    %320 = vsyncpa [#allocation4], 1
    %s321 = scalar_lea.sflag [#allocation4], 1
    %322 = vsyncpa %s321, 1

</llo_original>
